<compile_context>
chip_gen: v6e
topology: v6e:2x2x1
jax: 0.10.0
libtpu: 0.0.40
codegen_flags: <defaults>
</compile_context>

<pallas_src>
import jax
import jax.numpy as jnp
from jax.experimental import pallas as pl
from jax.experimental.pallas import tpu as pltpu

_HIDDEN = 128
_TB_MAX = 4096  # batch-tile cap; working set at 4096 rows is only ~3 MiB of VMEM


def _round_up(x, m):
    return ((x + m - 1) // m) * m


def _pick_batch_tile(B):
    """Full batch when tiny; otherwise >=2 balanced, 8-aligned grid steps."""
    if B <= 16:
        return B  # single step; Pallas handles the sublane padding
    return min(_TB_MAX, _round_up(pl.cdiv(B, 2), 8))


def _mlp_kernel(z_ref, a_ref, w1z_ref, w1a_ref, b1_ref,
                w2_ref, b2_ref, w3_ref, b3_ref, out_ref):
    # In-kernel bf16 cast of the activations (avoids a wrapper-side HBM pass).
    z = z_ref[...].astype(jnp.bfloat16)
    a = a_ref[...].astype(jnp.bfloat16)
    # Layer 1: split-K linear (replaces torch.cat) + ReLU, f32 accumulation.
    h1 = (jnp.dot(z, w1z_ref[...], preferred_element_type=jnp.float32)
          + jnp.dot(a, w1a_ref[...], preferred_element_type=jnp.float32)
          + b1_ref[...])
    h1 = jnp.maximum(h1, 0.0).astype(jnp.bfloat16)
    # Layer 2: Linear + ReLU.
    h2 = jnp.dot(h1, w2_ref[...], preferred_element_type=jnp.float32) + b2_ref[...]
    h2 = jnp.maximum(h2, 0.0).astype(jnp.bfloat16)
    # Layer 3: Linear -> unpadded (tb, latent) f32 output tile.
    out = jnp.dot(h2, w3_ref[...], preferred_element_type=jnp.float32) + b3_ref[...]
    out_ref[...] = out.astype(out_ref.dtype)


def prepare_params(params, latent_dim):
    """One-time parameter massaging (W1 split, bf16 weights, f32 biases).

    Call once at init; dynamics_predictor_forward consumes the result, so the
    per-call path has zero extra XLA pad/set/cast kernels.
    """
    w1, b1, w2, b2, w3, b3 = params
    return (
        w1[:latent_dim].astype(jnp.bfloat16),              # W1_z (latent, 128)
        w1[latent_dim:].astype(jnp.bfloat16),              # W1_a (action, 128)
        jnp.asarray(b1, jnp.float32).reshape(1, _HIDDEN),  # b1
        w2.astype(jnp.bfloat16),                           # W2 (128, 128)
        jnp.asarray(b2, jnp.float32).reshape(1, _HIDDEN),  # b2
        w3.astype(jnp.bfloat16),                           # W3 (128, latent)
        jnp.asarray(b3, jnp.float32).reshape(1, -1),       # b3 (1, latent)
    )


def dynamics_predictor_forward(z, a, prepped):
    """z: (B, latent_dim) f32, a: (B, action_dim) f32 -> (B, latent_dim) f32."""
    w1_z, w1_a, b1, w2, b2, w3, b3 = prepped
    B, latent_dim = z.shape
    action_dim = a.shape[1]

    tb = _pick_batch_tile(B)
    grid = (pl.cdiv(B, tb),)

    act_spec = lambda feat: pl.BlockSpec((tb, feat), lambda i: (i, 0))
    res_spec = lambda r, c: pl.BlockSpec((r, c), lambda i: (0, 0))  # VMEM-resident

    flops = 2 * B * _HIDDEN * (latent_dim + action_dim + _HIDDEN + latent_dim)
    bytes_accessed = (B * (latent_dim + action_dim) * 4          # z, a (f32 in)
                      + B * latent_dim * 4                        # out (f32)
                      + (latent_dim + action_dim) * _HIDDEN * 2   # W1 (bf16)
                      + _HIDDEN * _HIDDEN * 2                     # W2 (bf16)
                      + _HIDDEN * latent_dim * 2                  # W3 (bf16)
                      + (2 * _HIDDEN + latent_dim) * 4)           # biases (f32)

    return pl.pallas_call(
        _mlp_kernel,
        out_shape=jax.ShapeDtypeStruct((B, latent_dim), jnp.float32),
        grid=grid,
        in_specs=[
            act_spec(latent_dim),            # z
            act_spec(action_dim),            # a
            res_spec(latent_dim, _HIDDEN),   # W1_z
            res_spec(action_dim, _HIDDEN),   # W1_a
            res_spec(1, _HIDDEN),            # b1
            res_spec(_HIDDEN, _HIDDEN),      # W2
            res_spec(1, _HIDDEN),            # b2
            res_spec(_HIDDEN, latent_dim),   # W3 (unpadded)
            res_spec(1, latent_dim),         # b3 (unpadded)
        ],
        out_specs=pl.BlockSpec((tb, latent_dim), lambda i: (i, 0)),
        compiler_params=pltpu.CompilerParams(
            dimension_semantics=("parallel",)),
        cost_estimate=pl.CostEstimate(
            flops=flops, transcendentals=0, bytes_accessed=bytes_accessed),
    )(z, a, w1_z, w1_a, b1, w2, b2, w3, b3)


def init_params(latent_dim, action_dim, key):
    """Deterministic synthetic parameters (shapes mirror the nn.Linear layers,
    stored transposed as (in_features, out_features))."""
    k1, k2, k3 = jax.random.split(key, 3)
    in_dim = latent_dim + action_dim

    def linear_init(k, fan_in, fan_out):
        bound = 1.0 / jnp.sqrt(fan_in)
        kw, kb = jax.random.split(k)
        w = jax.random.uniform(kw, (fan_in, fan_out), jnp.float32, -bound, bound)
        b = jax.random.uniform(kb, (1, fan_out), jnp.float32, -bound, bound)
        return w, b

    w1, b1 = linear_init(k1, in_dim, _HIDDEN)
    w2, b2 = linear_init(k2, _HIDDEN, _HIDDEN)
    w3, b3 = linear_init(k3, _HIDDEN, latent_dim)
    return (w1, b1, w2, b2, w3, b3)


def reference_forward(z, a, params):
    """Pure-JAX reference mirroring the kernel's bf16-in / f32-accum numerics."""
    w1, b1, w2, b2, w3, b3 = params
    za = jnp.concatenate([z, a], axis=-1).astype(jnp.bfloat16)
    h1 = jnp.maximum(
        jnp.dot(za, w1.astype(jnp.bfloat16), preferred_element_type=jnp.float32) + b1, 0.0)
    h2 = jnp.maximum(
        jnp.dot(h1.astype(jnp.bfloat16), w2.astype(jnp.bfloat16),
                preferred_element_type=jnp.float32) + b2, 0.0)
    return jnp.dot(h2.astype(jnp.bfloat16), w3.astype(jnp.bfloat16),
                   preferred_element_type=jnp.float32) + b3


if __name__ == "__main__":
    latent_dim = 32
    action_dim = 8
    batch = 2

    key = jax.random.PRNGKey(0)
    kz, ka, kp = jax.random.split(key, 3)
    z = jax.random.normal(kz, (batch, latent_dim), jnp.float32)
    a = jax.random.normal(ka, (batch, action_dim), jnp.float32)
    params = init_params(latent_dim, action_dim, kp)
    prepped = prepare_params(params, latent_dim)  # one-time, outside the hot path

    fwd = jax.jit(dynamics_predictor_forward)
    out = jax.block_until_ready(fwd(z, a, prepped))
    ref = reference_forward(z, a, params)
    assert out.shape == (batch, latent_dim)
    assert jnp.allclose(out, ref, atol=2e-3, rtol=2e-3)

    # Also exercise the >=2-grid-step path (with a remainder batch tile).
    B2 = 100
    kz2, ka2 = jax.random.split(jax.random.PRNGKey(1))
    z2 = jax.random.normal(kz2, (B2, latent_dim), jnp.float32)
    a2 = jax.random.normal(ka2, (B2, action_dim), jnp.float32)
    out2 = jax.block_until_ready(fwd(z2, a2, prepped))
    ref2 = reference_forward(z2, a2, params)
    assert out2.shape == (B2, latent_dim)
    assert jnp.allclose(out2, ref2, atol=2e-3, rtol=2e-3)

    # TODO(synk): for tiny-batch sequential rollouts, fuse timesteps into one
    # pallas_call (grid over T marked "arbitrary", latent kept in VMEM scratch,
    # weights resident) — the 10x-class win noted in the perf review.
    print("KERNEL_OK")
</pallas_src>

<mosaic_0001>
module attributes {stable_mosaic.version = 11 : i64} {
  func.func @_mlp_kernel(%arg0: i32, %arg1: memref<2x32xf32, #tpu.memory_space<vmem>>, %arg2: memref<2x8xf32, #tpu.memory_space<vmem>>, %arg3: memref<32x128xbf16, #tpu.memory_space<vmem>>, %arg4: memref<8x128xbf16, #tpu.memory_space<vmem>>, %arg5: memref<1x128xf32, #tpu.memory_space<vmem>>, %arg6: memref<128x128xbf16, #tpu.memory_space<vmem>>, %arg7: memref<1x128xf32, #tpu.memory_space<vmem>>, %arg8: memref<128x32xbf16, #tpu.memory_space<vmem>>, %arg9: memref<1x32xf32, #tpu.memory_space<vmem>>, %arg10: memref<2x32xf32, #tpu.memory_space<vmem>>) attributes {dimension_semantics = [#tpu.dimension_semantics<parallel>], iteration_bounds = array<i64: 1>, scalar_prefetch = 0 : i64, scratch_operands = 0 : i64, tpu.core_type = #tpu.core_type<tc>, window_params = [{transform_indices = @transform_0, window_bounds = array<i64: 2, 32>}, {transform_indices = @transform_1, window_bounds = array<i64: 2, 8>}, {pipeline_mode = #tpu.pipeline_mode<synchronous>, transform_indices = @transform_2, window_bounds = array<i64: 32, 128>}, {pipeline_mode = #tpu.pipeline_mode<synchronous>, transform_indices = @transform_3, window_bounds = array<i64: 8, 128>}, {pipeline_mode = #tpu.pipeline_mode<synchronous>, transform_indices = @transform_4, window_bounds = array<i64: 1, 128>}, {pipeline_mode = #tpu.pipeline_mode<synchronous>, transform_indices = @transform_5, window_bounds = array<i64: 128, 128>}, {pipeline_mode = #tpu.pipeline_mode<synchronous>, transform_indices = @transform_6, window_bounds = array<i64: 1, 128>}, {pipeline_mode = #tpu.pipeline_mode<synchronous>, transform_indices = @transform_7, window_bounds = array<i64: 128, 32>}, {pipeline_mode = #tpu.pipeline_mode<synchronous>, transform_indices = @transform_8, window_bounds = array<i64: 1, 32>}, {transform_indices = @transform_9, window_bounds = array<i64: 2, 32>}]} {
    %c0 = arith.constant 0 : index
    %c0_0 = arith.constant 0 : index
    %0 = vector.load %arg1[%c0, %c0_0] : memref<2x32xf32, #tpu.memory_space<vmem>>, vector<2x32xf32>
    %1 = arith.truncf %0 : vector<2x32xf32> to vector<2x32xbf16>
    %c0_1 = arith.constant 0 : index
    %c0_2 = arith.constant 0 : index
    %2 = vector.load %arg2[%c0_1, %c0_2] : memref<2x8xf32, #tpu.memory_space<vmem>>, vector<2x8xf32>
    %3 = arith.truncf %2 : vector<2x8xf32> to vector<2x8xbf16>
    %c0_3 = arith.constant 0 : index
    %c0_4 = arith.constant 0 : index
    %4 = vector.load %arg3[%c0_3, %c0_4] : memref<32x128xbf16, #tpu.memory_space<vmem>>, vector<32x128xbf16>
    %cst = arith.constant dense<0.000000e+00> : vector<2x128xf32>
    %5 = tpu.matmul %1, %4, %cst {dimension_numbers = #tpu.dot_dimension_numbers<[1], [0], [0], [1], [0, 0, 1, 1], [], []>} : vector<2x32xbf16>, vector<32x128xbf16>, vector<2x128xf32> -> vector<2x128xf32>
    %c0_5 = arith.constant 0 : index
    %c0_6 = arith.constant 0 : index
    %6 = vector.load %arg4[%c0_5, %c0_6] : memref<8x128xbf16, #tpu.memory_space<vmem>>, vector<8x128xbf16>
    %cst_7 = arith.constant dense<0.000000e+00> : vector<2x128xf32>
    %7 = tpu.matmul %3, %6, %cst_7 {dimension_numbers = #tpu.dot_dimension_numbers<[1], [0], [0], [1], [0, 0, 1, 1], [], []>} : vector<2x8xbf16>, vector<8x128xbf16>, vector<2x128xf32> -> vector<2x128xf32>
    %8 = arith.addf %5, %7 : vector<2x128xf32>
    %c0_8 = arith.constant 0 : index
    %c0_9 = arith.constant 0 : index
    %9 = vector.load %arg5[%c0_8, %c0_9] : memref<1x128xf32, #tpu.memory_space<vmem>>, vector<1x128xf32>
    %10 = vector.broadcast %9 : vector<1x128xf32> to vector<2x128xf32>
    %11 = arith.addf %8, %10 : vector<2x128xf32>
    %cst_10 = arith.constant 0.000000e+00 : f32
    %12 = vector.broadcast %cst_10 : f32 to vector<2x128xf32>
    %13 = arith.maximumf %11, %12 : vector<2x128xf32>
    %14 = arith.truncf %13 : vector<2x128xf32> to vector<2x128xbf16>
    %c0_11 = arith.constant 0 : index
    %c0_12 = arith.constant 0 : index
    %15 = vector.load %arg6[%c0_11, %c0_12] : memref<128x128xbf16, #tpu.memory_space<vmem>>, vector<128x128xbf16>
    %cst_13 = arith.constant dense<0.000000e+00> : vector<2x128xf32>
    %16 = tpu.matmul %14, %15, %cst_13 {dimension_numbers = #tpu.dot_dimension_numbers<[1], [0], [0], [1], [0, 0, 1, 1], [], []>} : vector<2x128xbf16>, vector<128x128xbf16>, vector<2x128xf32> -> vector<2x128xf32>
    %c0_14 = arith.constant 0 : index
    %c0_15 = arith.constant 0 : index
    %17 = vector.load %arg7[%c0_14, %c0_15] : memref<1x128xf32, #tpu.memory_space<vmem>>, vector<1x128xf32>
    %18 = vector.broadcast %17 : vector<1x128xf32> to vector<2x128xf32>
    %19 = arith.addf %16, %18 : vector<2x128xf32>
    %cst_16 = arith.constant 0.000000e+00 : f32
    %20 = vector.broadcast %cst_16 : f32 to vector<2x128xf32>
    %21 = arith.maximumf %19, %20 : vector<2x128xf32>
    %22 = arith.truncf %21 : vector<2x128xf32> to vector<2x128xbf16>
    %c0_17 = arith.constant 0 : index
    %c0_18 = arith.constant 0 : index
    %23 = vector.load %arg8[%c0_17, %c0_18] : memref<128x32xbf16, #tpu.memory_space<vmem>>, vector<128x32xbf16>
    %cst_19 = arith.constant dense<0.000000e+00> : vector<2x32xf32>
    %24 = tpu.matmul %22, %23, %cst_19 {dimension_numbers = #tpu.dot_dimension_numbers<[1], [0], [0], [1], [0, 0, 1, 1], [], []>} : vector<2x128xbf16>, vector<128x32xbf16>, vector<2x32xf32> -> vector<2x32xf32>
    %c0_20 = arith.constant 0 : index
    %c0_21 = arith.constant 0 : index
    %25 = vector.load %arg9[%c0_20, %c0_21] : memref<1x32xf32, #tpu.memory_space<vmem>>, vector<1x32xf32>
    %26 = vector.broadcast %25 : vector<1x32xf32> to vector<2x32xf32>
    %27 = arith.addf %24, %26 : vector<2x32xf32>
    %c0_22 = arith.constant 0 : index
    %c0_23 = arith.constant 0 : index
    %28 = vector.load %arg10[%c0_22, %c0_23] : memref<2x32xf32, #tpu.memory_space<vmem>>, vector<2x32xf32>
    tpu.vector_store %arg10[%c0_22, %c0_23], %27 {strides = array<i32>} : memref<2x32xf32, #tpu.memory_space<vmem>>, vector<2x32xf32>,
    return
  }
  func.func @transform_0(%arg0: i32) -> (i32, i32) {
    %c0_i32 = arith.constant 0 : i32
    %c0_i32_0 = arith.constant 0 : i32
    return %arg0, %c0_i32 : i32, i32
  }
  func.func @transform_1(%arg0: i32) -> (i32, i32) {
    %c0_i32 = arith.constant 0 : i32
    %c0_i32_0 = arith.constant 0 : i32
    return %arg0, %c0_i32 : i32, i32
  }
  func.func @transform_2(%arg0: i32) -> (i32, i32) {
    %c0_i32 = arith.constant 0 : i32
    %c0_i32_0 = arith.constant 0 : i32
    %c0_i32_1 = arith.constant 0 : i32
    return %c0_i32, %c0_i32_0 : i32, i32
  }
  func.func @transform_3(%arg0: i32) -> (i32, i32) {
    %c0_i32 = arith.constant 0 : i32
    %c0_i32_0 = arith.constant 0 : i32
    %c0_i32_1 = arith.constant 0 : i32
    return %c0_i32, %c0_i32_0 : i32, i32
  }
  func.func @transform_4(%arg0: i32) -> (i32, i32) {
    %c0_i32 = arith.constant 0 : i32
    %c0_i32_0 = arith.constant 0 : i32
    %c0_i32_1 = arith.constant 0 : i32
    return %c0_i32, %c0_i32_0 : i32, i32
  }
  func.func @transform_5(%arg0: i32) -> (i32, i32) {
    %c0_i32 = arith.constant 0 : i32
    %c0_i32_0 = arith.constant 0 : i32
    %c0_i32_1 = arith.constant 0 : i32
    return %c0_i32, %c0_i32_0 : i32, i32
  }
  func.func @transform_6(%arg0: i32) -> (i32, i32) {
    %c0_i32 = arith.constant 0 : i32
    %c0_i32_0 = arith.constant 0 : i32
    %c0_i32_1 = arith.constant 0 : i32
    return %c0_i32, %c0_i32_0 : i32, i32
  }
  func.func @transform_7(%arg0: i32) -> (i32, i32) {
    %c0_i32 = arith.constant 0 : i32
    %c0_i32_0 = arith.constant 0 : i32
    %c0_i32_1 = arith.constant 0 : i32
    return %c0_i32, %c0_i32_0 : i32, i32
  }
  func.func @transform_8(%arg0: i32) -> (i32, i32) {
    %c0_i32 = arith.constant 0 : i32
    %c0_i32_0 = arith.constant 0 : i32
    %c0_i32_1 = arith.constant 0 : i32
    return %c0_i32, %c0_i32_0 : i32, i32
  }
  func.func @transform_9(%arg0: i32) -> (i32, i32) {
    %c0_i32 = arith.constant 0 : i32
    %c0_i32_0 = arith.constant 0 : i32
    return %arg0, %c0_i32 : i32, i32
  }
}

</mosaic_0001>

<llo_original>
// kernel: dynamics_predictor_forward.1
$region0: #{dynamics_predictor_forward.1}
  #allocation0 [shape = 'u32[]', space=smem, size = 0x4, offset = 0x4, fixed_abs, tag = 'smem constant byte address 0x4 - core index']
  #allocation1 [shape = 'u32[144,128]{1,0:T(1,128)}', space=vmem, size = 0x12000, scoped, tag = 'internal scratch']
  %s0 = inlined_call_operand.vmem [shape: f32[2,32], index: 0, kind: input, shape index: {}]
  %s1 = inlined_call_operand.vmem [shape: f32[2,8], index: 1, kind: input, shape index: {}]
  %s2 = inlined_call_operand.vmem [shape: bf16[32,128], index: 2, kind: input, shape index: {}]
  %s3 = inlined_call_operand.vmem [shape: bf16[8,128], index: 3, kind: input, shape index: {}]
  %s4 = inlined_call_operand.vmem [shape: f32[1,128], index: 4, kind: input, shape index: {}]
  %s5 = inlined_call_operand.vmem [shape: bf16[128,128], index: 5, kind: input, shape index: {}]
  %s6 = inlined_call_operand.vmem [shape: f32[1,128], index: 6, kind: input, shape index: {}]
  %s7 = inlined_call_operand.vmem [shape: bf16[128,32], index: 7, kind: input, shape index: {}]
  %s8 = inlined_call_operand.vmem [shape: f32[1,32], index: 8, kind: input, shape index: {}]
  %s9 = inlined_call_operand.hbm [shape: f32[2,32], index: 9, kind: output, shape index: {}]
  %s10 = sld [smem:[#allocation0]]
  $region46: #{dynamics_predictor_forward.1} parent=0
    _
  %s12 = ssub.s32 1, %s10
  %s13 = scalar_select 0, %s12, %s10
  $region1: #{dynamics_predictor_forward.1} parent=0
    #allocation2 [shape = 'u8[1024]{0}', space=vmem, size = 0x400, scoped, tag = 'output window, operand 0, single buffered']
    #allocation3 [shape = 's32[1]{0}', space=sflag, size = 0x4, scoped, tag = 'scoped memory for dynamics_predictor_forward.1']
    %14 = vsyncpa [#allocation3], 0
    // Predicated region
    $region2: #{dynamics_predictor_forward.1} parent=1 // pred_check
      _
    $region3: #{dynamics_predictor_forward.1} parent=1 // pred_check_branch
      %16 = sbr.rel (0) target = $region5
    $region4: #{dynamics_predictor_forward.1} parent=1 // pred_region
      _
    $region5: #{dynamics_predictor_forward.1} parent=1 // pred_fallthru
      _
    // Predicated region
    $region6: #{dynamics_predictor_forward.1} parent=1 // pred_check
      _
    $region7: #{dynamics_predictor_forward.1} parent=1 // pred_check_branch
      %18 = sbr.rel (0) target = $region9
    $region8: #{dynamics_predictor_forward.1} parent=1 // pred_region
      _
    $region9: #{dynamics_predictor_forward.1} parent=1 // pred_fallthru
      _
    // Predicated region
    $region10: #{dynamics_predictor_forward.1} parent=1 // pred_check
      _
    $region11: #{dynamics_predictor_forward.1} parent=1 // pred_check_branch
      %20 = sbr.rel (0) target = $region13
    $region12: #{dynamics_predictor_forward.1} parent=1 // pred_region
      _
    $region13: #{dynamics_predictor_forward.1} parent=1 // pred_fallthru
      _
    // Predicated region
    $region14: #{dynamics_predictor_forward.1} parent=1 // pred_check
      _
    $region15: #{dynamics_predictor_forward.1} parent=1 // pred_check_branch
      %22 = sbr.rel (0) target = $region17
    $region16: #{dynamics_predictor_forward.1} parent=1 // pred_region
      _
    $region17: #{dynamics_predictor_forward.1} parent=1 // pred_fallthru
      _
    // Predicated region
    $region18: #{dynamics_predictor_forward.1} parent=1 // pred_check
      _
    $region19: #{dynamics_predictor_forward.1} parent=1 // pred_check_branch
      %24 = sbr.rel (0) target = $region21
    $region20: #{dynamics_predictor_forward.1} parent=1 // pred_region
      _
    $region21: #{dynamics_predictor_forward.1} parent=1 // pred_fallthru
      _
    // Predicated region
    $region22: #{dynamics_predictor_forward.1} parent=1 // pred_check
      _
    $region23: #{dynamics_predictor_forward.1} parent=1 // pred_check_branch
      %26 = sbr.rel (0) target = $region25
    $region24: #{dynamics_predictor_forward.1} parent=1 // pred_region
      _
    $region25: #{dynamics_predictor_forward.1} parent=1 // pred_fallthru
      _
    // Predicated region
    $region26: #{dynamics_predictor_forward.1} parent=1 // pred_check
      _
    $region27: #{dynamics_predictor_forward.1} parent=1 // pred_check_branch
      %28 = sbr.rel (0) target = $region29
    $region28: #{dynamics_predictor_forward.1} parent=1 // pred_region
      _
    $region29: #{dynamics_predictor_forward.1} parent=1 // pred_fallthru
      _
    // Predicated region
    $region30: #{dynamics_predictor_forward.1} parent=1 // pred_check
      _
    $region31: #{dynamics_predictor_forward.1} parent=1 // pred_check_branch
      %30 = sbr.rel (0) target = $region33
    $region32: #{dynamics_predictor_forward.1} parent=1 // pred_region
      _
    $region33: #{dynamics_predictor_forward.1} parent=1 // pred_fallthru
      _
    // Predicated region
    $region34: #{dynamics_predictor_forward.1} parent=1 // pred_check
      _
    $region35: #{dynamics_predictor_forward.1} parent=1 // pred_check_branch
      %32 = sbr.rel (0) target = $region37
    $region36: #{dynamics_predictor_forward.1} parent=1 // pred_region
      _
    $region37: #{dynamics_predictor_forward.1} parent=1 // pred_fallthru
      _
    %v34 = vld [vmem:[%s0] sm:$0x3]
    %v35 = vpack.c.bf16 %v34, %v34
    %v36 = vld [vmem:[%s1] sm:$0x3]
    %v37 = vpack.c.bf16 %v36, %v36
    %v38 = vld [vmem:[%s2] sm:$0xf]
    %v39 = vld [vmem:[%s2 + $0x4] sm:$0xf]
    %v40 = vld [vmem:[%s2 + $0x8] sm:$0xf]
    %v41 = vld [vmem:[%s2 + $0xc] sm:$0xf]
    %v42 = vld [vmem:[%s3] sm:$0xf]
    %vm43 = vcmask 64512
    %v45 = vsel %vm43, %v37, 0
    %vm47 = vcmask 1043456
    %v49 = vsel %vm47, %v42, 0
    %51 = vmatprep.subr.bf16.mxu0 0
    %52 = vmatpush1.bf16.msra.mxu0 0
    %53 = vmatprep.subr.bf16.mxu0 0
    %54 = vmatpush1.bf16.msra.mxu0 0
    %55 = vmatprep.subr.bf16.mxu0 0
    %56 = vmatpush1.bf16.msra.mxu0 0
    %57 = vmatprep.subr.bf16.mxu0 0
    %58 = vmatpush1.bf16.msra.mxu0 0
    %59 = vmatprep.subr.bf16.mxu0 0
    %60 = vmatpush1.bf16.msra.mxu0 0
    %61 = vmatprep.subr.bf16.mxu0 0
    %62 = vmatpush1.bf16.msra.mxu0 0
    %63 = vmatprep.subr.bf16.mxu0 0
    %64 = vmatpush1.bf16.msra.mxu0 0
    %65 = vmatprep.subr.bf16.mxu0 0
    %66 = vmatpush1.bf16.msra.mxu0 %v49
    %67 = vmatprep.subr.bf16.mxu0 0
    %68 = vmatpush2.bf16.msra.mxu0 0
    %69 = vmatprep.subr.bf16.mxu0 0
    %70 = vmatpush2.bf16.msra.mxu0 0
    %71 = vmatprep.subr.bf16.mxu0 0
    %72 = vmatpush2.bf16.msra.mxu0 0
    %73 = vmatprep.subr.bf16.mxu0 0
    %74 = vmatpush2.bf16.msra.mxu0 0
    %75 = vmatprep.subr.bf16.mxu0 0
    %76 = vmatpush2.bf16.msra.mxu0 0
    %77 = vmatprep.subr.bf16.mxu0 0
    %78 = vmatpush2.bf16.msra.mxu0 0
    %79 = vmatprep.subr.bf16.mxu0 0
    %80 = vmatpush2.bf16.msra.mxu0 0
    %81 = vmatprep.subr.bf16.mxu0 0
    %82 = vmatpush2.bf16.msra.mxu0 0
    %83 = vmatprep.mubr.bf16.mxu0 0
    %84 = vmatmul.mubr.bf16.gmra.mxu0 %v45
    %v85 = vpop.f32.mrf.mxu0
    %v86 = vadd.f32 0.0, %v85
    %v87 = vpop.f32.mrf.mxu0
    %v88 = vpop.f32.mrf.mxu0
    %v89 = vpop.f32.mrf.mxu0
    %90 = vdwg.mxu0
    %v95 = vunpack.c.l.b16 %v38
    %v96 = vunpack.c.l.b16 %v39
    %v97 = vunpack.c.l.b16 %v40
    %v98 = vunpack.c.l.b16 %v41
    %v99 = vpack.c.b16 %v96, %v95
    %v100 = vpack.c.b16 %v98, %v97
    %vm103 = vcmask 261120
    %v105 = vsel %vm103, %v35, 0
    %107 = vmatprep.subr.bf16.mxu0 0
    %108 = vmatpush1.bf16.msra.mxu0 0
    %109 = vmatprep.subr.bf16.mxu0 0
    %110 = vmatpush1.bf16.msra.mxu0 0
    %111 = vmatprep.subr.bf16.mxu0 0
    %112 = vmatpush1.bf16.msra.mxu0 0
    %113 = vmatprep.subr.bf16.mxu0 0
    %114 = vmatpush1.bf16.msra.mxu0 0
    %115 = vmatprep.subr.bf16.mxu0 0
    %116 = vmatpush1.bf16.msra.mxu0 0
    %117 = vmatprep.subr.bf16.mxu0 0
    %118 = vmatpush1.bf16.msra.mxu0 0
    %119 = vmatprep.subr.bf16.mxu0 0
    %120 = vmatpush1.bf16.msra.mxu0 %v100
    %121 = vmatprep.subr.bf16.mxu0 0
    %122 = vmatpush1.bf16.msra.mxu0 %v99
    %123 = vmatprep.subr.bf16.mxu0 0
    %124 = vmatpush2.bf16.msra.mxu0 0
    %125 = vmatprep.subr.bf16.mxu0 0
    %126 = vmatpush2.bf16.msra.mxu0 0
    %127 = vmatprep.subr.bf16.mxu0 0
    %128 = vmatpush2.bf16.msra.mxu0 0
    %129 = vmatprep.subr.bf16.mxu0 0
    %130 = vmatpush2.bf16.msra.mxu0 0
    %131 = vmatprep.subr.bf16.mxu0 0
    %132 = vmatpush2.bf16.msra.mxu0 0
    %133 = vmatprep.subr.bf16.mxu0 0
    %134 = vmatpush2.bf16.msra.mxu0 0
    %135 = vmatprep.subr.bf16.mxu0 0
    %136 = vmatpush2.bf16.msra.mxu0 0
    %137 = vmatprep.subr.bf16.mxu0 0
    %138 = vmatpush2.bf16.msra.mxu0 0
    %139 = vmatprep.mubr.bf16.mxu0 0
    %140 = vmatmul.mubr.bf16.gmra.mxu0 %v105
    %v141 = vpop.f32.mrf.mxu0
    %v142 = vadd.f32 %v86, %v141
    %v143 = vpop.f32.mrf.mxu0
    %v144 = vpop.f32.mrf.mxu0
    %v145 = vpop.f32.mrf.mxu0
    %146 = vdwg.mxu0
    %v147 = vld [vmem:[%s4] sm:$0x1]
    %v149 = vlaneseq
    %v150 = vshrl.u32 %v149, 7
    %v151 = vsub.s32 0, %v150
    %v152 = vrot.slane %v147, %v151
    %v154 = vadd.f32 %v142, %v152
    %v155 = vmax.f32 %v154, 0.0
    %v156 = vpack.c.bf16 %v155, %v155
    %v157 = vld [vmem:[%s5] sm:$0xf]
    %v158 = vld [vmem:[%s5 + $0x4] sm:$0xf]
    %v159 = vld [vmem:[%s5 + $0x8] sm:$0xf]
    %v160 = vld [vmem:[%s5 + $0xc] sm:$0xf]
    %v161 = vld [vmem:[%s5 + $0x10] sm:$0xf]
    %v162 = vld [vmem:[%s5 + $0x14] sm:$0xf]
    %v163 = vld [vmem:[%s5 + $0x18] sm:$0xf]
    %v164 = vld [vmem:[%s5 + $0x1c] sm:$0xf]
    %v165 = vld [vmem:[%s5 + $0x20] sm:$0xf]
    %v166 = vld [vmem:[%s5 + $0x24] sm:$0xf]
    %v167 = vld [vmem:[%s5 + $0x28] sm:$0xf]
    %v168 = vld [vmem:[%s5 + $0x2c] sm:$0xf]
    %v169 = vld [vmem:[%s5 + $0x30] sm:$0xf]
    %v170 = vld [vmem:[%s5 + $0x34] sm:$0xf]
    %v171 = vld [vmem:[%s5 + $0x38] sm:$0xf]
    %v172 = vld [vmem:[%s5 + $0x3c] sm:$0xf]
    %v173 = vld [vmem:[%s6] sm:$0x1]
    %v175 = vlaneseq
    %v176 = vshrl.u32 %v175, 7
    %v177 = vsub.s32 0, %v176
    %v178 = vrot.slane %v173, %v177
    %v196 = vunpack.c.l.b16 %v157
    %v197 = vunpack.c.l.b16 %v158
    %v198 = vunpack.c.l.b16 %v159
    %v199 = vunpack.c.l.b16 %v160
    %v200 = vunpack.c.l.b16 %v161
    %v201 = vunpack.c.l.b16 %v162
    %v202 = vunpack.c.l.b16 %v163
    %v203 = vunpack.c.l.b16 %v164
    %v204 = vunpack.c.l.b16 %v165
    %v205 = vunpack.c.l.b16 %v166
    %v206 = vunpack.c.l.b16 %v167
    %v207 = vunpack.c.l.b16 %v168
    %v208 = vunpack.c.l.b16 %v169
    %v209 = vunpack.c.l.b16 %v170
    %v210 = vunpack.c.l.b16 %v171
    %v211 = vunpack.c.l.b16 %v172
    %v212 = vpack.c.b16 %v197, %v196
    %v213 = vpack.c.b16 %v199, %v198
    %v214 = vpack.c.b16 %v201, %v200
    %v215 = vpack.c.b16 %v203, %v202
    %v216 = vpack.c.b16 %v205, %v204
    %v217 = vpack.c.b16 %v207, %v206
    %v218 = vpack.c.b16 %v209, %v208
    %v219 = vpack.c.b16 %v211, %v210
    %228 = vmatprep.subr.bf16.mxu0 0
    %229 = vmatpush1.bf16.msra.mxu0 %v219
    %230 = vmatprep.subr.bf16.mxu0 0
    %231 = vmatpush1.bf16.msra.mxu0 %v218
    %232 = vmatprep.subr.bf16.mxu0 0
    %233 = vmatpush1.bf16.msra.mxu0 %v217
    %234 = vmatprep.subr.bf16.mxu0 0
    %235 = vmatpush1.bf16.msra.mxu0 %v216
    %236 = vmatprep.subr.bf16.mxu0 0
    %237 = vmatpush1.bf16.msra.mxu0 %v215
    %238 = vmatprep.subr.bf16.mxu0 0
    %239 = vmatpush1.bf16.msra.mxu0 %v214
    %240 = vmatprep.subr.bf16.mxu0 0
    %241 = vmatpush1.bf16.msra.mxu0 %v213
    %242 = vmatprep.subr.bf16.mxu0 0
    %243 = vmatpush1.bf16.msra.mxu0 %v212
    %244 = vmatprep.subr.bf16.mxu0 0
    %245 = vmatpush2.bf16.msra.mxu0 0
    %246 = vmatprep.subr.bf16.mxu0 0
    %247 = vmatpush2.bf16.msra.mxu0 0
    %248 = vmatprep.subr.bf16.mxu0 0
    %249 = vmatpush2.bf16.msra.mxu0 0
    %250 = vmatprep.subr.bf16.mxu0 0
    %251 = vmatpush2.bf16.msra.mxu0 0
    %252 = vmatprep.subr.bf16.mxu0 0
    %253 = vmatpush2.bf16.msra.mxu0 0
    %254 = vmatprep.subr.bf16.mxu0 0
    %255 = vmatpush2.bf16.msra.mxu0 0
    %256 = vmatprep.subr.bf16.mxu0 0
    %257 = vmatpush2.bf16.msra.mxu0 0
    %258 = vmatprep.subr.bf16.mxu0 0
    %259 = vmatpush2.bf16.msra.mxu0 0
    %260 = vmatprep.mubr.bf16.mxu0 0
    %261 = vmatmul.mubr.bf16.gmra.mxu0 %v156
    %v262 = vpop.f32.mrf.mxu0
    %v263 = vadd.f32 %v178, %v262
    %v264 = vpop.f32.mrf.mxu0
    %v265 = vpop.f32.mrf.mxu0
    %v266 = vpop.f32.mrf.mxu0
    %267 = vdwg.mxu0
    %v268 = vmax.f32 %v263, 0.0
    %v269 = vpack.c.bf16 %v268, %v268
    %v270 = vld [vmem:[%s7] sm:$0xf]
    %v271 = vld [vmem:[%s7 + $0x4] sm:$0xf]
    %v272 = vld [vmem:[%s7 + $0x8] sm:$0xf]
    %v273 = vld [vmem:[%s7 + $0xc] sm:$0xf]
    %v274 = vld [vmem:[%s7 + $0x10] sm:$0xf]
    %v275 = vld [vmem:[%s7 + $0x14] sm:$0xf]
    %v276 = vld [vmem:[%s7 + $0x18] sm:$0xf]
    %v277 = vld [vmem:[%s7 + $0x1c] sm:$0xf]
    %v278 = vld [vmem:[%s7 + $0x20] sm:$0xf]
    %v279 = vld [vmem:[%s7 + $0x24] sm:$0xf]
    %v280 = vld [vmem:[%s7 + $0x28] sm:$0xf]
    %v281 = vld [vmem:[%s7 + $0x2c] sm:$0xf]
    %v282 = vld [vmem:[%s7 + $0x30] sm:$0xf]
    %v283 = vld [vmem:[%s7 + $0x34] sm:$0xf]
    %v284 = vld [vmem:[%s7 + $0x38] sm:$0xf]
    %v285 = vld [vmem:[%s7 + $0x3c] sm:$0xf]
    %v286 = vld [vmem:[%s8] sm:$0x1]
    %v288 = vlaneseq
    %v289 = vshrl.u32 %v288, 7
    %v290 = vsub.s32 0, %v289
    %v291 = vrot.slane %v286, %v290
    %v309 = vunpack.c.l.b16 %v270
    %v310 = vunpack.c.l.b16 %v271
    %v311 = vunpack.c.l.b16 %v272
    %v312 = vunpack.c.l.b16 %v273
    %v313 = vunpack.c.l.b16 %v274
    %v314 = vunpack.c.l.b16 %v275
    %v315 = vunpack.c.l.b16 %v276
    %v316 = vunpack.c.l.b16 %v277
    %v317 = vunpack.c.l.b16 %v278
    %v318 = vunpack.c.l.b16 %v279
    %v319 = vunpack.c.l.b16 %v280
    %v320 = vunpack.c.l.b16 %v281
    %v321 = vunpack.c.l.b16 %v282
    %v322 = vunpack.c.l.b16 %v283
    %v323 = vunpack.c.l.b16 %v284
    %v324 = vunpack.c.l.b16 %v285
    %v325 = vpack.c.b16 %v310, %v309
    %v326 = vpack.c.b16 %v312, %v311
    %v327 = vpack.c.b16 %v314, %v313
    %v328 = vpack.c.b16 %v316, %v315
    %v329 = vpack.c.b16 %v318, %v317
    %v330 = vpack.c.b16 %v320, %v319
    %v331 = vpack.c.b16 %v322, %v321
    %v332 = vpack.c.b16 %v324, %v323
    %341 = vmatprep.subr.bf16.mxu0 0
    %342 = vmatpush1.bf16.msra.mxu0 %v332
    %343 = vmatprep.subr.bf16.mxu0 0
    %344 = vmatpush1.bf16.msra.mxu0 %v331
    %345 = vmatprep.subr.bf16.mxu0 0
    %346 = vmatpush1.bf16.msra.mxu0 %v330
    %347 = vmatprep.subr.bf16.mxu0 0
    %348 = vmatpush1.bf16.msra.mxu0 %v329
    %349 = vmatprep.subr.bf16.mxu0 0
    %350 = vmatpush1.bf16.msra.mxu0 %v328
    %351 = vmatprep.subr.bf16.mxu0 0
    %352 = vmatpush1.bf16.msra.mxu0 %v327
    %353 = vmatprep.subr.bf16.mxu0 0
    %354 = vmatpush1.bf16.msra.mxu0 %v326
    %355 = vmatprep.subr.bf16.mxu0 0
    %356 = vmatpush1.bf16.msra.mxu0 %v325
    %357 = vmatprep.subr.bf16.mxu0 0
    %358 = vmatpush2.bf16.msra.mxu0 0
    %359 = vmatprep.subr.bf16.mxu0 0
    %360 = vmatpush2.bf16.msra.mxu0 0
    %361 = vmatprep.subr.bf16.mxu0 0
    %362 = vmatpush2.bf16.msra.mxu0 0
    %363 = vmatprep.subr.bf16.mxu0 0
    %364 = vmatpush2.bf16.msra.mxu0 0
    %365 = vmatprep.subr.bf16.mxu0 0
    %366 = vmatpush2.bf16.msra.mxu0 0
    %367 = vmatprep.subr.bf16.mxu0 0
    %368 = vmatpush2.bf16.msra.mxu0 0
    %369 = vmatprep.subr.bf16.mxu0 0
    %370 = vmatpush2.bf16.msra.mxu0 0
    %371 = vmatprep.subr.bf16.mxu0 0
    %372 = vmatpush2.bf16.msra.mxu0 0
    %373 = vmatprep.mubr.bf16.mxu0 0
    %374 = vmatmul.mubr.bf16.gmra.mxu0 %v269
    %v375 = vpop.f32.mrf.mxu0
    %v376 = vadd.f32 %v291, %v375
    %v377 = vpop.f32.mrf.mxu0
    %v378 = vpop.f32.mrf.mxu0
    %v379 = vpop.f32.mrf.mxu0
    %380 = vdwg.mxu0
    %vm381 = vcmask 254976
    %382 = vst.msk [vmem:[#allocation2] sm:$0x3] %vm381, %v376
    // Predicated region
    $region38: #{dynamics_predictor_forward.1} parent=1 // pred_check
      _
    $region39: #{dynamics_predictor_forward.1} parent=1 // pred_check_branch
      %384 = sbr.rel (0) target = $region41
    $region40: #{dynamics_predictor_forward.1} parent=1 // pred_region
      %s386 = ssub.s32 32, 32
      %387 = vsyncadd [#allocation3], %s386
      %s389 = sshll.u32 [#allocation2], 4
      %s390 = int_to_ptr.vmem [resolvable:$true] %s389
      %392 = dma.vmem_to_hbm [thread:$0]  %s390, 32, %s9, [#allocation3]
    $region41: #{dynamics_predictor_forward.1} parent=1 // pred_fallthru
      _
    // Predicated region
    $region42: #{dynamics_predictor_forward.1} parent=1 // pred_check
      _
    $region43: #{dynamics_predictor_forward.1} parent=1 // pred_check_branch
      %394 = sbr.rel (0) target = $region45
    $region44: #{dynamics_predictor_forward.1} parent=1 // pred_region
      %395 = dma.done [#allocation3], 32
    $region45: #{dynamics_predictor_forward.1} parent=1 // pred_fallthru
      _
    %396 = vsyncpa [#allocation3], 1

</llo_original>
